<compile_context>
chip_gen: v7x
topology: tpu7x:2x2x1
jax: 0.10.0
libtpu: 0.0.40
codegen_flags: <defaults>
</compile_context>

<pallas_src>
import functools

import jax
import jax.numpy as jnp
from jax.experimental import pallas as pl
from jax.experimental.pallas import tpu as pltpu


# ----------------------------------------------------------------------------
# Generation-aware configuration
# ----------------------------------------------------------------------------
def _tpu_config():
    """Returns (vmem_limit_bytes, vpu_conv_max_cin) for the current chip."""
    mib = 1024 * 1024
    vmem_cap = None
    kind = ""
    try:
        vmem_cap = int(pltpu.get_tpu_info().vmem_capacity_bytes)
    except Exception:
        vmem_cap = None
    try:
        kind = jax.devices()[0].device_kind.lower()
    except Exception:
        kind = ""

    if vmem_cap is None:
        # Unknown chip: conservative limit that is known-safe everywhere.
        return 32 * mib, 8
    if vmem_cap <= 64 * mib:
        # v7x-class: 64 MiB VMEM per TensorCore, ~3.2 TB/s HBM -> keep headroom,
        # and use the MXU for almost any contraction size (fast HBM leaves
        # little VPU slack).
        return 48 * mib, 4
    # v5e / v6e: 128 MiB physical VMEM.
    vpu_max = 16 if "v5" in kind else 8  # v5e's slower HBM hides more VPU work
    return 64 * mib, vpu_max


def _round_up(v, mult):
    return (v + mult - 1) // mult * mult


def _pick_spatial_tile(s_pad, c_in, c_out, vmem_limit):
    """Largest multiple-of-128 tile dividing s_pad whose double-buffered
    x + out tiles fit ~70% of the scoped VMEM budget."""
    bytes_per_lane = 8 * (c_in + c_out)            # 2 pipeline buffers x 4 B
    budget = int(0.7 * vmem_limit)
    max_ts = max(128, (budget // max(bytes_per_lane, 1)) // 128 * 128)
    max_ts = min(max_ts, 32768)                    # past ~32K lanes overhead is amortized
    n_lanes = s_pad // 128
    kmax = max(1, min(n_lanes, max_ts // 128))
    for k in range(kmax, 0, -1):
        if n_lanes % k == 0:
            return k * 128
    return 128


# ----------------------------------------------------------------------------
# In-kernel helpers
# ----------------------------------------------------------------------------
def _tiny_conv(wT, x, vpu_max_cin):
    """(C_out, C_in) @ (C_in, ts) -> (C_out, ts) in float32.

    For small C_in (generation-dependent threshold) use unrolled VPU
    broadcast-MACs with f32 accumulation; otherwise use the MXU.
    """
    c_out, c_in = wT.shape
    if c_in <= vpu_max_cin:
        w32 = wT.astype(jnp.float32)
        x32 = x.astype(jnp.float32)
        y = w32[:, 0:1] * x32[0:1, :]
        for c in range(1, c_in):
            y = y + w32[:, c:c + 1] * x32[c:c + 1, :]
        return y
    return jnp.dot(wT, x, preferred_element_type=jnp.float32)


# ----------------------------------------------------------------------------
# Fused single-call path (small problems: everything resident in VMEM)
# ----------------------------------------------------------------------------
def _fused_kernel(x_ref, w_ref, gamma_ref, beta_ref, o_ref, y_ref,
                  *, eps, m, vpu_max_cin):
    """Conv once into VMEM scratch, reduce batch stats, normalize + ReLU."""
    n = x_ref.shape[0]
    c_out = w_ref.shape[0]
    w = w_ref[...]

    sy = jnp.zeros((c_out, 1), jnp.float32)
    sq = jnp.zeros((c_out, 1), jnp.float32)
    for bidx in range(n):
        y = _tiny_conv(w, x_ref[bidx], vpu_max_cin)        # (C_out, S_pad) f32
        y_ref[bidx] = y
        sy = sy + jnp.sum(y, axis=-1, keepdims=True)
        sq = sq + jnp.sum(y * y, axis=-1, keepdims=True)

    inv_m = 1.0 / m
    mean = sy * inv_m
    # E[y^2] - E[y]^2 can cancel for |mean| >> std; clamp at zero.
    var = jnp.maximum(sq * inv_m - mean * mean, 0.0)
    scale = gamma_ref[...] * jax.lax.rsqrt(var + eps)      # (C_out, 1)
    shift = beta_ref[...] - mean * scale

    for bidx in range(n):
        o_ref[bidx] = jnp.maximum(y_ref[bidx] * scale + shift, 0.0).astype(o_ref.dtype)


# ----------------------------------------------------------------------------
# Two-pass tiled path (large problems)
# ----------------------------------------------------------------------------
def _stats_kernel(x_ref, sum_ref, gram_ref, *, vpu_max_cin):
    """Pass 1: per-batch sum_x (C_in,1) and Gram G = x @ x^T (C_in,C_in)."""
    s = pl.program_id(1)

    @pl.when(s == 0)
    def _():
        sum_ref[...] = jnp.zeros_like(sum_ref)
        gram_ref[...] = jnp.zeros_like(gram_ref)

    xb = x_ref[0].astype(jnp.float32)                       # (C_in, ts)
    sum_ref[0] = sum_ref[0] + jnp.sum(xb, axis=-1, keepdims=True)

    c_in = xb.shape[0]
    if c_in <= vpu_max_cin:
        # Unrolled VPU outer-product accumulation (no MXU, no tiny-matmul padding).
        for j in range(c_in):
            colj = jnp.sum(xb * xb[j:j + 1, :], axis=-1, keepdims=True)  # (C_in, 1)
            gram_ref[0, :, j:j + 1] = gram_ref[0, :, j:j + 1] + colj
    else:
        # MXU: contraction over the (large) spatial tile -> x @ x^T.
        gram_ref[0] = gram_ref[0] + jax.lax.dot_general(
            xb, xb, (((1,), (1,)), ((), ())), preferred_element_type=jnp.float32)


def _conv_bn_act_kernel(x_ref, w_eff_ref, shift_ref, o_ref, *, vpu_max_cin):
    """Pass 2: conv with scale-folded weights, add shift, ReLU, lane-dense store."""
    y = _tiny_conv(w_eff_ref[...], x_ref[0], vpu_max_cin)   # (C_out, ts) f32
    o_ref[0] = jnp.maximum(y + shift_ref[...], 0.0).astype(o_ref.dtype)


# ----------------------------------------------------------------------------
# Wrapper
# ----------------------------------------------------------------------------
@functools.partial(jax.jit, static_argnames=("eps", "force_path"))
def conv_1x1x1_forward(x, w, b, gamma, beta, *, eps=1e-5, force_path="auto"):
    """Forward of Conv_1x1x1: 1x1x1 Conv3d + BatchNorm3d (batch stats) + ReLU.

    x:     (N, C_in, D, H, W)   -- NCDHW, like PyTorch.
    w:     (C_out, C_in)        -- conv1.weight.reshape(C_out, C_in).
    b:     (C_out,)             -- conv1.bias; cancelled by BN batch-mean subtraction.
    gamma: (C_out,)             -- BatchNorm3d weight.
    beta:  (C_out,)             -- BatchNorm3d bias.
    force_path: "auto" | "fused" | "tiled"  (static; "auto" picks by VMEM fit).
    """
    del b  # conv bias cancels against the batch mean in training-mode BN
    N, C_in, D, H, W = x.shape
    C_out = w.shape[0]
    S = D * H * W
    S_pad = _round_up(S, 128)          # keep all stores lane-dense
    m = float(N * S)                   # true element count (padding excluded)

    vmem_limit, vpu_max_cin = _tpu_config()

    x3 = x.reshape(N, C_in, S)         # free row-major view, no transpose
    if S_pad != S:
        x3 = jnp.pad(x3, ((0, 0), (0, 0), (0, S_pad - S)))  # zeros: neutral for stats

    w32 = w.astype(jnp.float32)
    gamma2 = gamma.reshape(C_out, 1).astype(jnp.float32)
    beta2 = beta.reshape(C_out, 1).astype(jnp.float32)

    # x (double buffer) + out (double buffer) + f32 y scratch, all resident.
    fused_bytes = 4 * N * S_pad * (2 * (C_in + C_out) + C_out)
    use_fused = (force_path == "fused") or (
        force_path == "auto" and N <= 32 and fused_bytes <= int(0.5 * vmem_limit))

    if use_fused:
        # ---- Single fused call: conv -> stats -> normalize + ReLU ----------
        o3 = pl.pallas_call(
            functools.partial(_fused_kernel, eps=eps, m=m, vpu_max_cin=vpu_max_cin),
            out_shape=jax.ShapeDtypeStruct((N, C_out, S_pad), x.dtype),
            grid=(1,),
            in_specs=[
                pl.BlockSpec((N, C_in, S_pad), lambda i: (0, 0, 0)),
                pl.BlockSpec((C_out, C_in), lambda i: (0, 0)),
                pl.BlockSpec((C_out, 1), lambda i: (0, 0)),
                pl.BlockSpec((C_out, 1), lambda i: (0, 0)),
            ],
            out_specs=pl.BlockSpec((N, C_out, S_pad), lambda i: (0, 0, 0)),
            scratch_shapes=[pltpu.VMEM((N, C_out, S_pad), jnp.float32)],
            compiler_params=pltpu.CompilerParams(vmem_limit_bytes=vmem_limit),
        )(x3, w32, gamma2, beta2)
    else:
        ts = _pick_spatial_tile(S_pad, C_in, C_out, vmem_limit)
        ns = S_pad // ts

        # ---- Pass 1: x statistics (sum_x + Gram), per-batch partials -------
        psum, pgram = pl.pallas_call(
            functools.partial(_stats_kernel, vpu_max_cin=vpu_max_cin),
            out_shape=(
                jax.ShapeDtypeStruct((N, C_in, 1), jnp.float32),
                jax.ShapeDtypeStruct((N, C_in, C_in), jnp.float32),
            ),
            grid_spec=pltpu.PrefetchScalarGridSpec(
                num_scalar_prefetch=0,
                grid=(N, ns),
                in_specs=[pl.BlockSpec((1, C_in, ts), lambda n, s: (n, 0, s))],
                out_specs=(
                    pl.BlockSpec((1, C_in, 1), lambda n, s: (n, 0, 0)),
                    pl.BlockSpec((1, C_in, C_in), lambda n, s: (n, 0, 0)),
                ),
            ),
            compiler_params=pltpu.CompilerParams(
                dimension_semantics=("parallel", "arbitrary"),
                vmem_limit_bytes=vmem_limit),
        )(x3)

        # ---- Fold BN into per-channel affine (scale folded into the weight) -
        sx = jnp.sum(psum, axis=0)                           # (C_in, 1)
        G = jnp.sum(pgram, axis=0)                           # (C_in, C_in)
        inv_m = 1.0 / m
        mean_x = sx * inv_m
        mean_y = w32 @ mean_x                                # (C_out, 1)
        ey2 = jnp.sum((w32 @ G) * w32, axis=-1, keepdims=True) * inv_m
        # E[y^2] - E[y]^2 can cancel for |mean| >> std; clamp at zero.
        var = jnp.maximum(ey2 - mean_y * mean_y, 0.0)
        scale = gamma2 * jax.lax.rsqrt(var + eps)
        shift = beta2 - mean_y * scale
        w_eff = scale * w32                                  # (C_out, C_in)

        # ---- Pass 2: conv (scale-folded) + shift + ReLU ---------------------
        o3 = pl.pallas_call(
            functools.partial(_conv_bn_act_kernel, vpu_max_cin=vpu_max_cin),
            out_shape=jax.ShapeDtypeStruct((N, C_out, S_pad), x.dtype),
            grid_spec=pltpu.PrefetchScalarGridSpec(
                num_scalar_prefetch=0,
                grid=(N, ns),
                in_specs=[
                    pl.BlockSpec((1, C_in, ts), lambda n, s: (n, 0, s)),
                    pl.BlockSpec((C_out, C_in), lambda n, s: (0, 0)),
                    pl.BlockSpec((C_out, 1), lambda n, s: (0, 0)),
                ],
                out_specs=pl.BlockSpec((1, C_out, ts), lambda n, s: (n, 0, s)),
            ),
            compiler_params=pltpu.CompilerParams(
                dimension_semantics=("parallel", "parallel"),
                vmem_limit_bytes=vmem_limit),
        )(x3, w_eff, shift)

    if S_pad != S:
        o3 = o3[:, :, :S]
    return o3.reshape(N, C_out, D, H, W)


# ----------------------------------------------------------------------------
# Self-test
# ----------------------------------------------------------------------------
if __name__ == "__main__":
    def run_case(N, C_in, C_out, D, H, W, force_path, seed=0):
        key = jax.random.PRNGKey(seed)
        kx, kw, kb = jax.random.split(key, 3)
        x = jax.random.normal(kx, (N, C_in, D, H, W), dtype=jnp.float32)
        # Conv3d weight is conceptually (C_out, C_in, 1, 1, 1); stored as (C_out, C_in).
        w = jax.random.normal(kw, (C_out, C_in), dtype=jnp.float32) * (1.0 / jnp.sqrt(C_in))
        b = jax.random.normal(kb, (C_out,), dtype=jnp.float32) * 0.1
        gamma = jnp.ones((C_out,), dtype=jnp.float32)   # BatchNorm3d default weight
        beta = jnp.zeros((C_out,), dtype=jnp.float32)   # BatchNorm3d default bias

        out = conv_1x1x1_forward(x, w, b, gamma, beta, force_path=force_path)
        jax.block_until_ready(out)
        assert out.shape == (N, C_out, D, H, W)

        # Pure-jnp reference (includes the conv bias; it must cancel in BN).
        y_ref = jnp.einsum("ncdhw,oc->nodhw", x, w) + b.reshape(1, -1, 1, 1, 1)
        mu = y_ref.mean(axis=(0, 2, 3, 4), keepdims=True)
        vr = y_ref.var(axis=(0, 2, 3, 4), keepdims=True)          # biased variance
        ref = (y_ref - mu) * jax.lax.rsqrt(vr + 1e-5)
        ref = jnp.maximum(ref * gamma.reshape(1, -1, 1, 1, 1)
                          + beta.reshape(1, -1, 1, 1, 1), 0.0)
        err = float(jnp.abs(out - ref).max())
        assert jnp.allclose(out, ref, atol=2e-4, rtol=2e-4), (force_path, err)

    # Small shapes consistent with the module: N=2, C_in=4, C_out=8.
    run_case(2, 4, 8, 8, 8, 8, "auto")    # fused single-call path (VMEM-resident)
    run_case(2, 4, 8, 8, 8, 8, "tiled")   # two-pass tiled path (Gram stats + conv+BN+ReLU)
    run_case(2, 4, 8, 5, 6, 7, "auto")    # S not a multiple of 128 -> lane-padding path
    print("KERNEL_OK")
</pallas_src>

<mosaic_0001>
module attributes {stable_mosaic.version = 11 : i64} {
  func.func @_fused_kernel(%arg0: i32, %arg1: memref<2x4x512xf32, #tpu.memory_space<vmem>>, %arg2: memref<8x4xf32, #tpu.memory_space<vmem>>, %arg3: memref<8x1xf32, #tpu.memory_space<vmem>>, %arg4: memref<8x1xf32, #tpu.memory_space<vmem>>, %arg5: memref<2x8x512xf32, #tpu.memory_space<vmem>>, %arg6: memref<2x8x512xf32, #tpu.memory_space<vmem>>) attributes {dimension_semantics = [#tpu.dimension_semantics<arbitrary>], iteration_bounds = array<i64: 1>, scalar_prefetch = 0 : i64, scratch_operands = 1 : i64, tpu.core_type = #tpu.core_type<tc>, window_params = [{pipeline_mode = #tpu.pipeline_mode<synchronous>, transform_indices = @transform_0, window_bounds = array<i64: 2, 4, 512>}, {pipeline_mode = #tpu.pipeline_mode<synchronous>, transform_indices = @transform_1, window_bounds = array<i64: 8, 4>}, {pipeline_mode = #tpu.pipeline_mode<synchronous>, transform_indices = @transform_2, window_bounds = array<i64: 8, 1>}, {pipeline_mode = #tpu.pipeline_mode<synchronous>, transform_indices = @transform_3, window_bounds = array<i64: 8, 1>}, {pipeline_mode = #tpu.pipeline_mode<synchronous>, transform_indices = @transform_4, window_bounds = array<i64: 2, 8, 512>}]} {
    %c0 = arith.constant 0 : index
    %c0_0 = arith.constant 0 : index
    %0 = vector.load %arg2[%c0, %c0_0] : memref<8x4xf32, #tpu.memory_space<vmem>>, vector<8x4xf32>
    %cst = arith.constant 0.000000e+00 : f32
    %1 = vector.broadcast %cst : f32 to vector<8x1xf32>
    %cst_1 = arith.constant 0.000000e+00 : f32
    %2 = vector.broadcast %cst_1 : f32 to vector<8x1xf32>
    %c0_2 = arith.constant 0 : index
    %c0_3 = arith.constant 0 : index
    %c0_4 = arith.constant 0 : index
    %3 = vector.load %arg1[%c0_2, %c0_3, %c0_4] : memref<2x4x512xf32, #tpu.memory_space<vmem>>, vector<1x4x512xf32>
    %4 = vector.shape_cast %3 : vector<1x4x512xf32> to vector<4x512xf32>
    %5 = vector.extract_strided_slice %0 {offsets = [0, 0], sizes = [8, 1], strides = [1, 1]} : vector<8x4xf32> to vector<8x1xf32>
    %6 = vector.extract_strided_slice %4 {offsets = [0, 0], sizes = [1, 512], strides = [1, 1]} : vector<4x512xf32> to vector<1x512xf32>
    %7 = vector.broadcast %5 : vector<8x1xf32> to vector<8x512xf32>
    %8 = vector.broadcast %6 : vector<1x512xf32> to vector<8x512xf32>
    %9 = arith.mulf %7, %8 : vector<8x512xf32>
    %10 = vector.extract_strided_slice %0 {offsets = [0, 1], sizes = [8, 1], strides = [1, 1]} : vector<8x4xf32> to vector<8x1xf32>
    %11 = vector.extract_strided_slice %4 {offsets = [1, 0], sizes = [1, 512], strides = [1, 1]} : vector<4x512xf32> to vector<1x512xf32>
    %12 = vector.broadcast %10 : vector<8x1xf32> to vector<8x512xf32>
    %13 = vector.broadcast %11 : vector<1x512xf32> to vector<8x512xf32>
    %14 = arith.mulf %12, %13 : vector<8x512xf32>
    %15 = arith.addf %9, %14 : vector<8x512xf32>
    %16 = vector.extract_strided_slice %0 {offsets = [0, 2], sizes = [8, 1], strides = [1, 1]} : vector<8x4xf32> to vector<8x1xf32>
    %17 = vector.extract_strided_slice %4 {offsets = [2, 0], sizes = [1, 512], strides = [1, 1]} : vector<4x512xf32> to vector<1x512xf32>
    %18 = vector.broadcast %16 : vector<8x1xf32> to vector<8x512xf32>
    %19 = vector.broadcast %17 : vector<1x512xf32> to vector<8x512xf32>
    %20 = arith.mulf %18, %19 : vector<8x512xf32>
    %21 = arith.addf %15, %20 : vector<8x512xf32>
    %22 = vector.extract_strided_slice %0 {offsets = [0, 3], sizes = [8, 1], strides = [1, 1]} : vector<8x4xf32> to vector<8x1xf32>
    %23 = vector.extract_strided_slice %4 {offsets = [3, 0], sizes = [1, 512], strides = [1, 1]} : vector<4x512xf32> to vector<1x512xf32>
    %24 = vector.broadcast %22 : vector<8x1xf32> to vector<8x512xf32>
    %25 = vector.broadcast %23 : vector<1x512xf32> to vector<8x512xf32>
    %26 = arith.mulf %24, %25 : vector<8x512xf32>
    %27 = arith.addf %21, %26 : vector<8x512xf32>
    %c0_5 = arith.constant 0 : index
    %c0_6 = arith.constant 0 : index
    %c0_7 = arith.constant 0 : index
    %28 = vector.load %arg6[%c0_5, %c0_6, %c0_7] : memref<2x8x512xf32, #tpu.memory_space<vmem>>, vector<1x8x512xf32>
    %29 = vector.shape_cast %28 : vector<1x8x512xf32> to vector<8x512xf32>
    %30 = vector.shape_cast %27 : vector<8x512xf32> to vector<1x8x512xf32>
    tpu.vector_store %arg6[%c0_5, %c0_6, %c0_7], %30 {strides = array<i32>} : memref<2x8x512xf32, #tpu.memory_space<vmem>>, vector<1x8x512xf32>,
    %cst_8 = arith.constant dense<0.000000e+00> : vector<8xf32>
    %31 = vector.multi_reduction <add>, %27, %cst_8 [1] : vector<8x512xf32> to vector<8xf32>
    %32 = vector.shape_cast %31 : vector<8xf32> to vector<8x1xf32>
    %33 = arith.addf %1, %32 : vector<8x1xf32>
    %34 = arith.mulf %27, %27 : vector<8x512xf32>
    %cst_9 = arith.constant dense<0.000000e+00> : vector<8xf32>
    %35 = vector.multi_reduction <add>, %34, %cst_9 [1] : vector<8x512xf32> to vector<8xf32>
    %36 = vector.shape_cast %35 : vector<8xf32> to vector<8x1xf32>
    %37 = arith.addf %2, %36 : vector<8x1xf32>
    %c1 = arith.constant 1 : index
    %c0_10 = arith.constant 0 : index
    %c0_11 = arith.constant 0 : index
    %38 = vector.load %arg1[%c1, %c0_10, %c0_11] : memref<2x4x512xf32, #tpu.memory_space<vmem>>, vector<1x4x512xf32>
    %39 = vector.shape_cast %38 : vector<1x4x512xf32> to vector<4x512xf32>
    %40 = vector.extract_strided_slice %0 {offsets = [0, 0], sizes = [8, 1], strides = [1, 1]} : vector<8x4xf32> to vector<8x1xf32>
    %41 = vector.extract_strided_slice %39 {offsets = [0, 0], sizes = [1, 512], strides = [1, 1]} : vector<4x512xf32> to vector<1x512xf32>
    %42 = vector.broadcast %40 : vector<8x1xf32> to vector<8x512xf32>
    %43 = vector.broadcast %41 : vector<1x512xf32> to vector<8x512xf32>
    %44 = arith.mulf %42, %43 : vector<8x512xf32>
    %45 = vector.extract_strided_slice %0 {offsets = [0, 1], sizes = [8, 1], strides = [1, 1]} : vector<8x4xf32> to vector<8x1xf32>
    %46 = vector.extract_strided_slice %39 {offsets = [1, 0], sizes = [1, 512], strides = [1, 1]} : vector<4x512xf32> to vector<1x512xf32>
    %47 = vector.broadcast %45 : vector<8x1xf32> to vector<8x512xf32>
    %48 = vector.broadcast %46 : vector<1x512xf32> to vector<8x512xf32>
    %49 = arith.mulf %47, %48 : vector<8x512xf32>
    %50 = arith.addf %44, %49 : vector<8x512xf32>
    %51 = vector.extract_strided_slice %0 {offsets = [0, 2], sizes = [8, 1], strides = [1, 1]} : vector<8x4xf32> to vector<8x1xf32>
    %52 = vector.extract_strided_slice %39 {offsets = [2, 0], sizes = [1, 512], strides = [1, 1]} : vector<4x512xf32> to vector<1x512xf32>
    %53 = vector.broadcast %51 : vector<8x1xf32> to vector<8x512xf32>
    %54 = vector.broadcast %52 : vector<1x512xf32> to vector<8x512xf32>
    %55 = arith.mulf %53, %54 : vector<8x512xf32>
    %56 = arith.addf %50, %55 : vector<8x512xf32>
    %57 = vector.extract_strided_slice %0 {offsets = [0, 3], sizes = [8, 1], strides = [1, 1]} : vector<8x4xf32> to vector<8x1xf32>
    %58 = vector.extract_strided_slice %39 {offsets = [3, 0], sizes = [1, 512], strides = [1, 1]} : vector<4x512xf32> to vector<1x512xf32>
    %59 = vector.broadcast %57 : vector<8x1xf32> to vector<8x512xf32>
    %60 = vector.broadcast %58 : vector<1x512xf32> to vector<8x512xf32>
    %61 = arith.mulf %59, %60 : vector<8x512xf32>
    %62 = arith.addf %56, %61 : vector<8x512xf32>
    %c1_12 = arith.constant 1 : index
    %c0_13 = arith.constant 0 : index
    %c0_14 = arith.constant 0 : index
    %63 = vector.load %arg6[%c1_12, %c0_13, %c0_14] : memref<2x8x512xf32, #tpu.memory_space<vmem>>, vector<1x8x512xf32>
    %64 = vector.shape_cast %63 : vector<1x8x512xf32> to vector<8x512xf32>
    %65 = vector.shape_cast %62 : vector<8x512xf32> to vector<1x8x512xf32>
    tpu.vector_store %arg6[%c1_12, %c0_13, %c0_14], %65 {strides = array<i32>} : memref<2x8x512xf32, #tpu.memory_space<vmem>>, vector<1x8x512xf32>,
    %cst_15 = arith.constant dense<0.000000e+00> : vector<8xf32>
    %66 = vector.multi_reduction <add>, %62, %cst_15 [1] : vector<8x512xf32> to vector<8xf32>
    %67 = vector.shape_cast %66 : vector<8xf32> to vector<8x1xf32>
    %68 = arith.addf %33, %67 : vector<8x1xf32>
    %69 = arith.mulf %62, %62 : vector<8x512xf32>
    %cst_16 = arith.constant dense<0.000000e+00> : vector<8xf32>
    %70 = vector.multi_reduction <add>, %69, %cst_16 [1] : vector<8x512xf32> to vector<8xf32>
    %71 = vector.shape_cast %70 : vector<8xf32> to vector<8x1xf32>
    %72 = arith.addf %37, %71 : vector<8x1xf32>
    %cst_17 = arith.constant 9.765625E-4 : f32
    %73 = vector.broadcast %cst_17 : f32 to vector<8x1xf32>
    %74 = arith.mulf %68, %73 : vector<8x1xf32>
    %cst_18 = arith.constant 9.765625E-4 : f32
    %75 = vector.broadcast %cst_18 : f32 to vector<8x1xf32>
    %76 = arith.mulf %72, %75 : vector<8x1xf32>
    %77 = arith.mulf %74, %74 : vector<8x1xf32>
    %78 = arith.subf %76, %77 : vector<8x1xf32>
    %cst_19 = arith.constant 0.000000e+00 : f32
    %79 = vector.broadcast %cst_19 : f32 to vector<8x1xf32>
    %80 = arith.maximumf %78, %79 : vector<8x1xf32>
    %c0_20 = arith.constant 0 : index
    %c0_21 = arith.constant 0 : index
    %81 = vector.load %arg3[%c0_20, %c0_21] : memref<8x1xf32, #tpu.memory_space<vmem>>, vector<8x1xf32>
    %cst_22 = arith.constant 9.99999974E-6 : f32
    %82 = vector.broadcast %cst_22 : f32 to vector<8x1xf32>
    %83 = arith.addf %80, %82 : vector<8x1xf32>
    %84 = math.rsqrt %83 : vector<8x1xf32>
    %85 = arith.mulf %81, %84 : vector<8x1xf32>
    %c0_23 = arith.constant 0 : index
    %c0_24 = arith.constant 0 : index
    %86 = vector.load %arg4[%c0_23, %c0_24] : memref<8x1xf32, #tpu.memory_space<vmem>>, vector<8x1xf32>
    %87 = arith.mulf %74, %85 : vector<8x1xf32>
    %88 = arith.subf %86, %87 : vector<8x1xf32>
    %c0_25 = arith.constant 0 : index
    %c0_26 = arith.constant 0 : index
    %c0_27 = arith.constant 0 : index
    %89 = vector.load %arg6[%c0_25, %c0_26, %c0_27] : memref<2x8x512xf32, #tpu.memory_space<vmem>>, vector<1x8x512xf32>
    %90 = vector.shape_cast %89 : vector<1x8x512xf32> to vector<8x512xf32>
    %91 = vector.broadcast %85 : vector<8x1xf32> to vector<8x512xf32>
    %92 = arith.mulf %90, %91 : vector<8x512xf32>
    %93 = vector.broadcast %88 : vector<8x1xf32> to vector<8x512xf32>
    %94 = arith.addf %92, %93 : vector<8x512xf32>
    %cst_28 = arith.constant 0.000000e+00 : f32
    %95 = vector.broadcast %cst_28 : f32 to vector<8x512xf32>
    %96 = arith.maximumf %94, %95 : vector<8x512xf32>
    %c0_29 = arith.constant 0 : index
    %c0_30 = arith.constant 0 : index
    %c0_31 = arith.constant 0 : index
    %97 = vector.load %arg5[%c0_29, %c0_30, %c0_31] : memref<2x8x512xf32, #tpu.memory_space<vmem>>, vector<1x8x512xf32>
    %98 = vector.shape_cast %97 : vector<1x8x512xf32> to vector<8x512xf32>
    %99 = vector.shape_cast %96 : vector<8x512xf32> to vector<1x8x512xf32>
    tpu.vector_store %arg5[%c0_29, %c0_30, %c0_31], %99 {strides = array<i32>} : memref<2x8x512xf32, #tpu.memory_space<vmem>>, vector<1x8x512xf32>,
    %c1_32 = arith.constant 1 : index
    %c0_33 = arith.constant 0 : index
    %c0_34 = arith.constant 0 : index
    %100 = vector.load %arg6[%c1_32, %c0_33, %c0_34] : memref<2x8x512xf32, #tpu.memory_space<vmem>>, vector<1x8x512xf32>
    %101 = vector.shape_cast %100 : vector<1x8x512xf32> to vector<8x512xf32>
    %102 = vector.broadcast %85 : vector<8x1xf32> to vector<8x512xf32>
    %103 = arith.mulf %101, %102 : vector<8x512xf32>
    %104 = vector.broadcast %88 : vector<8x1xf32> to vector<8x512xf32>
    %105 = arith.addf %103, %104 : vector<8x512xf32>
    %cst_35 = arith.constant 0.000000e+00 : f32
    %106 = vector.broadcast %cst_35 : f32 to vector<8x512xf32>
    %107 = arith.maximumf %105, %106 : vector<8x512xf32>
    %c1_36 = arith.constant 1 : index
    %c0_37 = arith.constant 0 : index
    %c0_38 = arith.constant 0 : index
    %108 = vector.load %arg5[%c1_36, %c0_37, %c0_38] : memref<2x8x512xf32, #tpu.memory_space<vmem>>, vector<1x8x512xf32>
    %109 = vector.shape_cast %108 : vector<1x8x512xf32> to vector<8x512xf32>
    %110 = vector.shape_cast %107 : vector<8x512xf32> to vector<1x8x512xf32>
    tpu.vector_store %arg5[%c1_36, %c0_37, %c0_38], %110 {strides = array<i32>} : memref<2x8x512xf32, #tpu.memory_space<vmem>>, vector<1x8x512xf32>,
    return
  }
  func.func @transform_0(%arg0: i32) -> (i32, i32, i32) {
    %c0_i32 = arith.constant 0 : i32
    %c0_i32_0 = arith.constant 0 : i32
    %c0_i32_1 = arith.constant 0 : i32
    %c0_i32_2 = arith.constant 0 : i32
    return %c0_i32, %c0_i32_0, %c0_i32_1 : i32, i32, i32
  }
  func.func @transform_1(%arg0: i32) -> (i32, i32) {
    %c0_i32 = arith.constant 0 : i32
    %c0_i32_0 = arith.constant 0 : i32
    %c0_i32_1 = arith.constant 0 : i32
    return %c0_i32, %c0_i32_0 : i32, i32
  }
  func.func @transform_2(%arg0: i32) -> (i32, i32) {
    %c0_i32 = arith.constant 0 : i32
    %c0_i32_0 = arith.constant 0 : i32
    %c0_i32_1 = arith.constant 0 : i32
    return %c0_i32, %c0_i32_0 : i32, i32
  }
  func.func @transform_3(%arg0: i32) -> (i32, i32) {
    %c0_i32 = arith.constant 0 : i32
    %c0_i32_0 = arith.constant 0 : i32
    %c0_i32_1 = arith.constant 0 : i32
    return %c0_i32, %c0_i32_0 : i32, i32
  }
  func.func @transform_4(%arg0: i32) -> (i32, i32, i32) {
    %c0_i32 = arith.constant 0 : i32
    %c0_i32_0 = arith.constant 0 : i32
    %c0_i32_1 = arith.constant 0 : i32
    %c0_i32_2 = arith.constant 0 : i32
    return %c0_i32, %c0_i32_0, %c0_i32_1 : i32, i32, i32
  }
}

</mosaic_0001>

<llo_original>
// kernel: conv_1x1x1_forward.1
$region0: #{conv_1x1x1_forward.1}
  #allocation0 [shape = 'u32[]', space=smem, size = 0x4, offset = 0x4, fixed_abs, tag = 'smem constant byte address 0x4 - core index']
  #allocation1 [shape = 'u32[144,128]{1,0:T(1,128)}', space=vmem, size = 0x12000, scoped, tag = 'internal scratch']
  #allocation2 [shape = 'f32[2,8,512]{2,1,0:T(8,128)}', space=vmem, size = 0x8000, scoped, tag = 'scratch operand']
  %s0 = inlined_call_operand.vmem [shape: f32[2,4,512], index: 0, kind: input, shape index: {}]
  %s1 = inlined_call_operand.vmem [shape: f32[8,4], index: 1, kind: input, shape index: {}]
  %s2 = inlined_call_operand.vmem [shape: f32[8,1], index: 2, kind: input, shape index: {}]
  %s3 = inlined_call_operand.vmem [shape: f32[8,1], index: 3, kind: input, shape index: {}]
  %s4 = inlined_call_operand.vmem [shape: f32[2,8,512], index: 4, kind: output, shape index: {}]
  %s5 = sld [smem:[#allocation0]]
  $region26: #{conv_1x1x1_forward.1} parent=0
    _
  %s7 = ssub.s32 1, %s5
  %s8 = scalar_select 0, %s7, %s5
  // Predicated region
  $region2: #{conv_1x1x1_forward.1} parent=0 // pred_check
    _
  $region3: #{conv_1x1x1_forward.1} parent=0 // pred_check_branch
    %10 = sbr.rel (0) target = $region5
  $region4: #{conv_1x1x1_forward.1} parent=0 // pred_region
    _
  $region5: #{conv_1x1x1_forward.1} parent=0 // pred_fallthru
    _
  // Predicated region
  $region6: #{conv_1x1x1_forward.1} parent=0 // pred_check
    _
  $region7: #{conv_1x1x1_forward.1} parent=0 // pred_check_branch
    %12 = sbr.rel (0) target = $region9
  $region8: #{conv_1x1x1_forward.1} parent=0 // pred_region
    _
  $region9: #{conv_1x1x1_forward.1} parent=0 // pred_fallthru
    _
  // Predicated region
  $region10: #{conv_1x1x1_forward.1} parent=0 // pred_check
    _
  $region11: #{conv_1x1x1_forward.1} parent=0 // pred_check_branch
    %14 = sbr.rel (0) target = $region13
  $region12: #{conv_1x1x1_forward.1} parent=0 // pred_region
    _
  $region13: #{conv_1x1x1_forward.1} parent=0 // pred_fallthru
    _
  // Predicated region
  $region14: #{conv_1x1x1_forward.1} parent=0 // pred_check
    _
  $region15: #{conv_1x1x1_forward.1} parent=0 // pred_check_branch
    %16 = sbr.rel (0) target = $region17
  $region16: #{conv_1x1x1_forward.1} parent=0 // pred_region
    _
  $region17: #{conv_1x1x1_forward.1} parent=0 // pred_fallthru
    _
  %v17 = vld [vmem:[%s1] sm:$0xff]
  %v18 = vld [vmem:[%s0] sm:$0xff]
  %v19 = vld [vmem:[%s0 + $0x8] sm:$0xff]
  %21 = vset.pattern.permute.xlu0 0
  %22 = vperm.xlu0 %21, %v17
  %v23 = vpop.permute.xlu0 %22
  %v27 = vlaneseq
  %v28 = vshrl.u32 %v27, 7
  %v29 = vsub.s32 0, %v28
  %v30 = vrot.slane %v18, %v29
  %v31 = vlaneseq
  %v32 = vshrl.u32 %v31, 7
  %v33 = vsub.s32 4, %v32
  %v34 = vrot.slane %v18, %v33
  %v35 = vlaneseq
  %v36 = vshrl.u32 %v35, 7
  %v37 = vsub.s32 0, %v36
  %v38 = vrot.slane %v19, %v37
  %v39 = vlaneseq
  %v40 = vshrl.u32 %v39, 7
  %v41 = vsub.s32 4, %v40
  %v42 = vrot.slane %v19, %v41
  %v47 = vlaneseq
  %v48 = vshrl.u32 %v47, 7
  %v49 = vsub.s32 0, %v48
  %v50 = vrot.slane %v30, %v49
  %v51 = vlaneseq
  %v52 = vshrl.u32 %v51, 7
  %v53 = vsub.s32 0, %v52
  %v54 = vrot.slane %v34, %v53
  %v55 = vlaneseq
  %v56 = vshrl.u32 %v55, 7
  %v57 = vsub.s32 0, %v56
  %v58 = vrot.slane %v38, %v57
  %v59 = vlaneseq
  %v60 = vshrl.u32 %v59, 7
  %v61 = vsub.s32 0, %v60
  %v62 = vrot.slane %v42, %v61
  %v63 = vmul.f32 %v23, %v50
  %v64 = vmul.f32 %v23, %v54
  %v65 = vmul.f32 %v23, %v58
  %v66 = vmul.f32 %v23, %v62
  %67 = vset.pattern.permute.xlu0 1
  %68 = vperm.xlu0 %67, %v17
  %v69 = vpop.permute.xlu0 %68
  %v71 = vlaneseq
  %v72 = vshrl.u32 %v71, 7
  %v73 = vsub.s32 1, %v72
  %v74 = vrot.slane %v18, %v73
  %v75 = vlaneseq
  %v76 = vshrl.u32 %v75, 7
  %v77 = vsub.s32 5, %v76
  %v78 = vrot.slane %v18, %v77
  %v79 = vlaneseq
  %v80 = vshrl.u32 %v79, 7
  %v81 = vsub.s32 1, %v80
  %v82 = vrot.slane %v19, %v81
  %v83 = vlaneseq
  %v84 = vshrl.u32 %v83, 7
  %v85 = vsub.s32 5, %v84
  %v86 = vrot.slane %v19, %v85
  %v91 = vlaneseq
  %v92 = vshrl.u32 %v91, 7
  %v93 = vsub.s32 1, %v92
  %v94 = vrot.slane %v74, %v93
  %v95 = vlaneseq
  %v96 = vshrl.u32 %v95, 7
  %v97 = vsub.s32 1, %v96
  %v98 = vrot.slane %v78, %v97
  %v99 = vlaneseq
  %v100 = vshrl.u32 %v99, 7
  %v101 = vsub.s32 1, %v100
  %v102 = vrot.slane %v82, %v101
  %v103 = vlaneseq
  %v104 = vshrl.u32 %v103, 7
  %v105 = vsub.s32 1, %v104
  %v106 = vrot.slane %v86, %v105
  %v107 = vmul.f32 %v69, %v94
  %v108 = vmul.f32 %v69, %v98
  %v109 = vmul.f32 %v69, %v102
  %v110 = vmul.f32 %v69, %v106
  %v111 = vadd.f32 %v63, %v107
  %v112 = vadd.f32 %v64, %v108
  %v113 = vadd.f32 %v65, %v109
  %v114 = vadd.f32 %v66, %v110
  %115 = vset.pattern.permute.xlu0 2
  %116 = vperm.xlu0 %115, %v17
  %v117 = vpop.permute.xlu0 %116
  %v119 = vlaneseq
  %v120 = vshrl.u32 %v119, 7
  %v121 = vsub.s32 2, %v120
  %v122 = vrot.slane %v18, %v121
  %v123 = vlaneseq
  %v124 = vshrl.u32 %v123, 7
  %v125 = vsub.s32 6, %v124
  %v126 = vrot.slane %v18, %v125
  %v127 = vlaneseq
  %v128 = vshrl.u32 %v127, 7
  %v129 = vsub.s32 2, %v128
  %v130 = vrot.slane %v19, %v129
  %v131 = vlaneseq
  %v132 = vshrl.u32 %v131, 7
  %v133 = vsub.s32 6, %v132
  %v134 = vrot.slane %v19, %v133
  %v139 = vlaneseq
  %v140 = vshrl.u32 %v139, 7
  %v141 = vsub.s32 2, %v140
  %v142 = vrot.slane %v122, %v141
  %v143 = vlaneseq
  %v144 = vshrl.u32 %v143, 7
  %v145 = vsub.s32 2, %v144
  %v146 = vrot.slane %v126, %v145
  %v147 = vlaneseq
  %v148 = vshrl.u32 %v147, 7
  %v149 = vsub.s32 2, %v148
  %v150 = vrot.slane %v130, %v149
  %v151 = vlaneseq
  %v152 = vshrl.u32 %v151, 7
  %v153 = vsub.s32 2, %v152
  %v154 = vrot.slane %v134, %v153
  %v155 = vmul.f32 %v117, %v142
  %v156 = vmul.f32 %v117, %v146
  %v157 = vmul.f32 %v117, %v150
  %v158 = vmul.f32 %v117, %v154
  %v159 = vadd.f32 %v111, %v155
  %v160 = vadd.f32 %v112, %v156
  %v161 = vadd.f32 %v113, %v157
  %v162 = vadd.f32 %v114, %v158
  %163 = vset.pattern.permute.xlu0 3
  %164 = vperm.xlu0 %163, %v17
  %v165 = vpop.permute.xlu0 %164
  %v167 = vlaneseq
  %v168 = vshrl.u32 %v167, 7
  %v169 = vsub.s32 3, %v168
  %v170 = vrot.slane %v18, %v169
  %v171 = vlaneseq
  %v172 = vshrl.u32 %v171, 7
  %v173 = vsub.s32 7, %v172
  %v174 = vrot.slane %v18, %v173
  %v175 = vlaneseq
  %v176 = vshrl.u32 %v175, 7
  %v177 = vsub.s32 3, %v176
  %v178 = vrot.slane %v19, %v177
  %v179 = vlaneseq
  %v180 = vshrl.u32 %v179, 7
  %v181 = vsub.s32 7, %v180
  %v182 = vrot.slane %v19, %v181
  %v187 = vlaneseq
  %v188 = vshrl.u32 %v187, 7
  %v189 = vsub.s32 3, %v188
  %v190 = vrot.slane %v170, %v189
  %v191 = vlaneseq
  %v192 = vshrl.u32 %v191, 7
  %v193 = vsub.s32 3, %v192
  %v194 = vrot.slane %v174, %v193
  %v195 = vlaneseq
  %v196 = vshrl.u32 %v195, 7
  %v197 = vsub.s32 3, %v196
  %v198 = vrot.slane %v178, %v197
  %v199 = vlaneseq
  %v200 = vshrl.u32 %v199, 7
  %v201 = vsub.s32 3, %v200
  %v202 = vrot.slane %v182, %v201
  %v203 = vmul.f32 %v165, %v190
  %v204 = vmul.f32 %v165, %v194
  %v205 = vmul.f32 %v165, %v198
  %v206 = vmul.f32 %v165, %v202
  %v207 = vadd.f32 %v159, %v203
  %v208 = vadd.f32 %v160, %v204
  %v209 = vadd.f32 %v161, %v205
  %v210 = vadd.f32 %v162, %v206
  %211 = vst [vmem:[#allocation2] sm:$0xff] %v207
  %212 = vst [vmem:[#allocation2 + $0x8] sm:$0xff] %v208
  %213 = vst [vmem:[#allocation2 + $0x10] sm:$0xff] %v209
  %214 = vst [vmem:[#allocation2 + $0x18] sm:$0xff] %v210
  %v215 = vadd.f32 %v207, %v208
  %v216 = vadd.f32 %v215, %v209
  %v217 = vadd.f32 %v216, %v210
  %218 = vadd.xlane.f32.xlu0 %v217
  %v219 = vpop.xlane.xlu0 %218
  %v220 = vadd.f32 %v219, 0.0
  %v221 = vmul.f32 %v207, %v207
  %v222 = vmul.f32 %v208, %v208
  %v223 = vmul.f32 %v209, %v209
  %v224 = vmul.f32 %v210, %v210
  %v225 = vadd.f32 %v221, %v222
  %v226 = vadd.f32 %v225, %v223
  %v227 = vadd.f32 %v226, %v224
  %228 = vadd.xlane.f32.xlu0 %v227
  %v229 = vpop.xlane.xlu0 %228
  %v230 = vadd.f32 %v229, 0.0
  %s231 = scalar_lea.vmem %s0, 16
  %v232 = vld [vmem:[%s231] sm:$0xff]
  %v233 = vld [vmem:[%s231 + $0x8] sm:$0xff]
  %v236 = vlaneseq
  %v237 = vshrl.u32 %v236, 7
  %v238 = vsub.s32 0, %v237
  %v239 = vrot.slane %v232, %v238
  %v240 = vlaneseq
  %v241 = vshrl.u32 %v240, 7
  %v242 = vsub.s32 4, %v241
  %v243 = vrot.slane %v232, %v242
  %v244 = vlaneseq
  %v245 = vshrl.u32 %v244, 7
  %v246 = vsub.s32 0, %v245
  %v247 = vrot.slane %v233, %v246
  %v248 = vlaneseq
  %v249 = vshrl.u32 %v248, 7
  %v250 = vsub.s32 4, %v249
  %v251 = vrot.slane %v233, %v250
  %v256 = vlaneseq
  %v257 = vshrl.u32 %v256, 7
  %v258 = vsub.s32 0, %v257
  %v259 = vrot.slane %v239, %v258
  %v260 = vlaneseq
  %v261 = vshrl.u32 %v260, 7
  %v262 = vsub.s32 0, %v261
  %v263 = vrot.slane %v243, %v262
  %v264 = vlaneseq
  %v265 = vshrl.u32 %v264, 7
  %v266 = vsub.s32 0, %v265
  %v267 = vrot.slane %v247, %v266
  %v268 = vlaneseq
  %v269 = vshrl.u32 %v268, 7
  %v270 = vsub.s32 0, %v269
  %v271 = vrot.slane %v251, %v270
  %v272 = vmul.f32 %v23, %v259
  %v273 = vmul.f32 %v23, %v263
  %v274 = vmul.f32 %v23, %v267
  %v275 = vmul.f32 %v23, %v271
  %v276 = vlaneseq
  %v277 = vshrl.u32 %v276, 7
  %v278 = vsub.s32 1, %v277
  %v279 = vrot.slane %v232, %v278
  %v280 = vlaneseq
  %v281 = vshrl.u32 %v280, 7
  %v282 = vsub.s32 5, %v281
  %v283 = vrot.slane %v232, %v282
  %v284 = vlaneseq
  %v285 = vshrl.u32 %v284, 7
  %v286 = vsub.s32 1, %v285
  %v287 = vrot.slane %v233, %v286
  %v288 = vlaneseq
  %v289 = vshrl.u32 %v288, 7
  %v290 = vsub.s32 5, %v289
  %v291 = vrot.slane %v233, %v290
  %v296 = vlaneseq
  %v297 = vshrl.u32 %v296, 7
  %v298 = vsub.s32 1, %v297
  %v299 = vrot.slane %v279, %v298
  %v300 = vlaneseq
  %v301 = vshrl.u32 %v300, 7
  %v302 = vsub.s32 1, %v301
  %v303 = vrot.slane %v283, %v302
  %v304 = vlaneseq
  %v305 = vshrl.u32 %v304, 7
  %v306 = vsub.s32 1, %v305
  %v307 = vrot.slane %v287, %v306
  %v308 = vlaneseq
  %v309 = vshrl.u32 %v308, 7
  %v310 = vsub.s32 1, %v309
  %v311 = vrot.slane %v291, %v310
  %v312 = vmul.f32 %v69, %v299
  %v313 = vmul.f32 %v69, %v303
  %v314 = vmul.f32 %v69, %v307
  %v315 = vmul.f32 %v69, %v311
  %v316 = vadd.f32 %v272, %v312
  %v317 = vadd.f32 %v273, %v313
  %v318 = vadd.f32 %v274, %v314
  %v319 = vadd.f32 %v275, %v315
  %v320 = vlaneseq
  %v321 = vshrl.u32 %v320, 7
  %v322 = vsub.s32 2, %v321
  %v323 = vrot.slane %v232, %v322
  %v324 = vlaneseq
  %v325 = vshrl.u32 %v324, 7
  %v326 = vsub.s32 6, %v325
  %v327 = vrot.slane %v232, %v326
  %v328 = vlaneseq
  %v329 = vshrl.u32 %v328, 7
  %v330 = vsub.s32 2, %v329
  %v331 = vrot.slane %v233, %v330
  %v332 = vlaneseq
  %v333 = vshrl.u32 %v332, 7
  %v334 = vsub.s32 6, %v333
  %v335 = vrot.slane %v233, %v334
  %v340 = vlaneseq
  %v341 = vshrl.u32 %v340, 7
  %v342 = vsub.s32 2, %v341
  %v343 = vrot.slane %v323, %v342
  %v344 = vlaneseq
  %v345 = vshrl.u32 %v344, 7
  %v346 = vsub.s32 2, %v345
  %v347 = vrot.slane %v327, %v346
  %v348 = vlaneseq
  %v349 = vshrl.u32 %v348, 7
  %v350 = vsub.s32 2, %v349
  %v351 = vrot.slane %v331, %v350
  %v352 = vlaneseq
  %v353 = vshrl.u32 %v352, 7
  %v354 = vsub.s32 2, %v353
  %v355 = vrot.slane %v335, %v354
  %v356 = vmul.f32 %v117, %v343
  %v357 = vmul.f32 %v117, %v347
  %v358 = vmul.f32 %v117, %v351
  %v359 = vmul.f32 %v117, %v355
  %v360 = vadd.f32 %v316, %v356
  %v361 = vadd.f32 %v317, %v357
  %v362 = vadd.f32 %v318, %v358
  %v363 = vadd.f32 %v319, %v359
  %v364 = vlaneseq
  %v365 = vshrl.u32 %v364, 7
  %v366 = vsub.s32 3, %v365
  %v367 = vrot.slane %v232, %v366
  %v368 = vlaneseq
  %v369 = vshrl.u32 %v368, 7
  %v370 = vsub.s32 7, %v369
  %v371 = vrot.slane %v232, %v370
  %v372 = vlaneseq
  %v373 = vshrl.u32 %v372, 7
  %v374 = vsub.s32 3, %v373
  %v375 = vrot.slane %v233, %v374
  %v376 = vlaneseq
  %v377 = vshrl.u32 %v376, 7
  %v378 = vsub.s32 7, %v377
  %v379 = vrot.slane %v233, %v378
  %v384 = vlaneseq
  %v385 = vshrl.u32 %v384, 7
  %v386 = vsub.s32 3, %v385
  %v387 = vrot.slane %v367, %v386
  %v388 = vlaneseq
  %v389 = vshrl.u32 %v388, 7
  %v390 = vsub.s32 3, %v389
  %v391 = vrot.slane %v371, %v390
  %v392 = vlaneseq
  %v393 = vshrl.u32 %v392, 7
  %v394 = vsub.s32 3, %v393
  %v395 = vrot.slane %v375, %v394
  %v396 = vlaneseq
  %v397 = vshrl.u32 %v396, 7
  %v398 = vsub.s32 3, %v397
  %v399 = vrot.slane %v379, %v398
  %v400 = vmul.f32 %v165, %v387
  %v401 = vmul.f32 %v165, %v391
  %v402 = vmul.f32 %v165, %v395
  %v403 = vmul.f32 %v165, %v399
  %v404 = vadd.f32 %v360, %v400
  %v405 = vadd.f32 %v361, %v401
  %v406 = vadd.f32 %v362, %v402
  %v407 = vadd.f32 %v363, %v403
  %s408 = scalar_lea.vmem [#allocation2], 32
  %409 = vst [vmem:[%s408] sm:$0xff] %v404
  %410 = vst [vmem:[%s408 + $0x8] sm:$0xff] %v405
  %411 = vst [vmem:[%s408 + $0x10] sm:$0xff] %v406
  %412 = vst [vmem:[%s408 + $0x18] sm:$0xff] %v407
  %v413 = vadd.f32 %v404, %v405
  %v414 = vadd.f32 %v413, %v406
  %v415 = vadd.f32 %v414, %v407
  %416 = vadd.xlane.f32.xlu0 %v415
  %v417 = vpop.xlane.xlu0 %416
  %v418 = vadd.f32 %v220, %v417
  %v419 = vmul.f32 %v404, %v404
  %v420 = vmul.f32 %v405, %v405
  %v421 = vmul.f32 %v406, %v406
  %v422 = vmul.f32 %v407, %v407
  %v423 = vadd.f32 %v419, %v420
  %v424 = vadd.f32 %v423, %v421
  %v425 = vadd.f32 %v424, %v422
  %426 = vadd.xlane.f32.xlu0 %v425
  %v427 = vpop.xlane.xlu0 %426
  %v428 = vadd.f32 %v230, %v427
  %v429 = vmul.f32 %v418, 0.0009765625
  %v430 = vmul.f32 %v428, 0.0009765625
  %v431 = vmul.f32 %v429, %v429
  %v432 = vsub.f32 %v430, %v431
  %v433 = vmax.f32 %v432, 0.0
  %v434 = vld [vmem:[%s2] sm:$0xff]
  %v435 = vadd.f32 %v433, 1e-05
  %v436 = vrsqrt.pop %v435
  %v437 = vmul.f32 %v434, %v436
  %v438 = vld [vmem:[%s3] sm:$0xff]
  %v439 = vmul.f32 %v429, %v437
  %v440 = vsub.f32 %v438, %v439
  %v441 = vld [vmem:[#allocation2] sm:$0xff]
  %v442 = vld [vmem:[#allocation2 + $0x8] sm:$0xff]
  %v443 = vld [vmem:[#allocation2 + $0x10] sm:$0xff]
  %v444 = vld [vmem:[#allocation2 + $0x18] sm:$0xff]
  %446 = vset.pattern.permute.xlu0 0
  %447 = vperm.xlu0 %446, %v437
  %v448 = vpop.permute.xlu0 %447
  %v450 = vmul.f32 %v441, %v448
  %v451 = vmul.f32 %v442, %v448
  %v452 = vmul.f32 %v443, %v448
  %v453 = vmul.f32 %v444, %v448
  %455 = vset.pattern.permute.xlu0 0
  %456 = vperm.xlu0 %455, %v440
  %v457 = vpop.permute.xlu0 %456
  %v459 = vadd.f32 %v450, %v457
  %v460 = vadd.f32 %v451, %v457
  %v461 = vadd.f32 %v452, %v457
  %v462 = vadd.f32 %v453, %v457
  %v463 = vmax.f32 %v459, 0.0
  %v464 = vmax.f32 %v460, 0.0
  %v465 = vmax.f32 %v461, 0.0
  %v466 = vmax.f32 %v462, 0.0
  %467 = vst [vmem:[%s4] sm:$0xff] %v463
  %468 = vst [vmem:[%s4 + $0x8] sm:$0xff] %v464
  %469 = vst [vmem:[%s4 + $0x10] sm:$0xff] %v465
  %470 = vst [vmem:[%s4 + $0x18] sm:$0xff] %v466
  %v471 = vld [vmem:[%s408] sm:$0xff]
  %v472 = vld [vmem:[%s408 + $0x8] sm:$0xff]
  %v473 = vld [vmem:[%s408 + $0x10] sm:$0xff]
  %v474 = vld [vmem:[%s408 + $0x18] sm:$0xff]
  %v475 = vmul.f32 %v471, %v448
  %v476 = vmul.f32 %v472, %v448
  %v477 = vmul.f32 %v473, %v448
  %v478 = vmul.f32 %v474, %v448
  %v479 = vadd.f32 %v475, %v457
  %v480 = vadd.f32 %v476, %v457
  %v481 = vadd.f32 %v477, %v457
  %v482 = vadd.f32 %v478, %v457
  %v483 = vmax.f32 %v479, 0.0
  %v484 = vmax.f32 %v480, 0.0
  %v485 = vmax.f32 %v481, 0.0
  %v486 = vmax.f32 %v482, 0.0
  %s487 = scalar_lea.vmem %s4, 32
  %488 = vst [vmem:[%s487] sm:$0xff] %v483
  %489 = vst [vmem:[%s487 + $0x8] sm:$0xff] %v484
  %490 = vst [vmem:[%s487 + $0x10] sm:$0xff] %v485
  %491 = vst [vmem:[%s487 + $0x18] sm:$0xff] %v486
  // Predicated region
  $region18: #{conv_1x1x1_forward.1} parent=0 // pred_check
    _
  $region19: #{conv_1x1x1_forward.1} parent=0 // pred_check_branch
    %493 = sbr.rel (0) target = $region21
  $region20: #{conv_1x1x1_forward.1} parent=0 // pred_region
    _
  $region21: #{conv_1x1x1_forward.1} parent=0 // pred_fallthru
    _
  // Predicated region
  $region22: #{conv_1x1x1_forward.1} parent=0 // pred_check
    _
  $region23: #{conv_1x1x1_forward.1} parent=0 // pred_check_branch
    %495 = sbr.rel (0) target = $region25
  $region24: #{conv_1x1x1_forward.1} parent=0 // pred_region
    _
  $region25: #{conv_1x1x1_forward.1} parent=0 // pred_fallthru
    _

</llo_original>
